<compile_context>
chip_gen: v6e
topology: v6e:2x2x1
jax: 0.10.0
libtpu: 0.0.40
codegen_flags: <defaults>
</compile_context>

<pallas_src>
import jax
import jax.numpy as jnp
from jax.experimental import pallas as pl
from jax.experimental.pallas import tpu as pltpu

WINDOW_SIZES = (1, 2, 3, 5)
NUM_FILTERS = 9
EMBEDDING_SIZE = 10
PMAX = max(WINDOW_SIZES) - 1     # global zero-padding on each side of the sequence
LANES = 128
NEG_INF = -1e30


def _round_up(x, m):
    return -(-x // m) * m


def _cdiv(a, b):
    return -(-a // b)


def make_kernel(n_time, nwf_p):
    """n_time = U = L + PMAX anchor positions; nwf_p = padded (window, filter) rows."""

    def kernel(x_ref, wb_ref, fcw_ref, fcb_ref, out_ref):
        # x_ref  : (K1, Bt)       bf16  flattened padded embeddings + constant-one row
        # wb_ref : (U*NWFp, K1)   bf16  banded conv weights (+ bias / -1e30 mask column)
        # fcw_ref: (C, NWFp)      f32
        # fcb_ref: (C, 1)         f32
        # out_ref: (C, Bt)        f32   softmax probabilities, batch on lanes

        # One MXU sweep gives every (time, window, filter) conv output, bias and
        # validity mask included (via the ones row of x).  f32 accumulation.
        h = jnp.dot(wb_ref[...], x_ref[...],
                    preferred_element_type=jnp.float32)            # (U*NWFp, Bt)

        # Max-pool over time == running max over the U tile-aligned row groups.
        # NOTE: U is small (12); if it ever grows, switch to lax.fori_loop(unroll=True).
        pooled = h[0:nwf_p, :]
        for u in range(1, n_time):
            pooled = jnp.maximum(pooled, h[u * nwf_p:(u + 1) * nwf_p, :])

        feat = jnp.tanh(pooled)                                    # (NWFp, Bt)

        # Tiny FC stays in f32 (negligible cost, a bit more accuracy).
        logits = (jnp.dot(fcw_ref[...], feat,
                          preferred_element_type=jnp.float32)
                  + fcb_ref[...])                                  # (C, Bt)

        # Softmax over classes (sublane axis); reciprocal on the otherwise-idle EUP.
        m = jnp.max(logits, axis=0, keepdims=True)
        e = jnp.exp(logits - m)
        s = jnp.sum(e, axis=0, keepdims=True)
        out_ref[...] = e * pl.reciprocal(s, approx=True)

    return kernel


def cnn_text_classifier_forward(tokens, params, *, max_block_batch=2048):
    """tokens: (B, L) int32 token ids.  Returns softmax probs (B, num_classes)."""
    emb_table = params["embedding"]          # (vocab, E)
    conv_ws = params["conv_w"]               # list of torch-layout (F, 1, ws, E)
    conv_bs = params["conv_b"]               # list of (F,)
    fc_w = params["fc_w"]                    # torch layout (C, F * n_w)
    fc_b = params["fc_b"]                    # (C,)

    B, L = tokens.shape
    E = emb_table.shape[1]
    F = conv_ws[0].shape[0]
    n_w = len(WINDOW_SIZES)
    C = fc_w.shape[0]
    U = L + PMAX                             # anchor (last-tap) positions
    Lp = L + 2 * PMAX                        # globally padded sequence length
    K = Lp * E                               # flattened padded embedding rows
    K1 = _round_up(K + 1, 8)                 # + constant-one (bias/mask) row + zero fill
    NWF = n_w * F
    NWFp = _round_up(NWF, 8)                 # pad filter rows to a sublane multiple

    # ---- batch tiling: lane-dense blocks, >=2 blocks when possible (v7x megacore) ----
    B_lane = _round_up(B, LANES)
    n_blocks = max(_cdiv(B_lane, max_block_batch), 2 if B_lane >= 2 * LANES else 1)
    Bt = _round_up(_cdiv(B_lane, n_blocks), LANES)
    n_blocks = _cdiv(B_lane, Bt)
    B_pad = Bt * n_blocks

    # ---- plain-JAX glue: embedding gather + batch-last flattened padded slab ---------
    # TODO(synk): the original module loads a gensim word2vec checkpoint for the
    # embedding table; the gather itself stays in XLA (fuses with the pack below).
    emb = jnp.take(emb_table, tokens, axis=0).astype(jnp.float32)   # (B, L, E)
    xt = jnp.transpose(emb, (1, 2, 0)).reshape(L * E, B)            # row = l*E + e
    xt = jnp.pad(xt, ((PMAX * E, PMAX * E), (0, 0)))                # zero seq padding
    x = jnp.concatenate(
        [xt,
         jnp.ones((1, B), jnp.float32),                             # bias / mask row
         jnp.zeros((K1 - K - 1, B), jnp.float32)], axis=0)          # (K1, B)
    x = jnp.pad(x, ((0, 0), (0, B_pad - B))).astype(jnp.bfloat16)   # (K1, B_pad)

    # ---- stacked anchor weights: W50[i*F+f, d*E+e] = W_i[f, d-(PMAX-ws_i+1), e] -------
    blocks = []
    for i, ws in enumerate(WINDOW_SIZES):
        w = conv_ws[i][:, 0, :, :].astype(jnp.float32)              # (F, ws, E)
        w = jnp.pad(w, ((0, 0), (PMAX + 1 - ws, 0), (0, 0)))        # right-align taps
        blocks.append(w.reshape(F, (PMAX + 1) * E))
    w50 = jnp.pad(jnp.concatenate(blocks, axis=0),
                  ((0, NWFp - NWF), (0, 0)))                        # (NWFp, (PMAX+1)*E)

    # ---- bias where (u, window, filter) is a real conv output, -1e30 otherwise -------
    thr = jnp.repeat(jnp.asarray([L + ws - 1 for ws in WINDOW_SIZES], jnp.int32), F)
    b_cat = jnp.concatenate([b.astype(jnp.float32) for b in conv_bs])          # (NWF,)
    bm = jnp.where(jnp.arange(U)[:, None] < thr[None, :],
                   b_cat[None, :], jnp.float32(NEG_INF))                       # (U, NWF)
    bm = jnp.pad(bm, ((0, 0), (0, NWFp - NWF)))                                # (U, NWFp)

    # ---- banded weight: W50 at column offset u*E, bias/mask in the ones column K -----
    rows = []
    for u in range(U):
        blk = jnp.pad(w50, ((0, 0), (u * E, K1 - u * E - (PMAX + 1) * E)))     # (NWFp, K1)
        blk = blk.at[:, K].set(bm[u])
        rows.append(blk)
    wband = jnp.concatenate(rows, axis=0).astype(jnp.bfloat16)                 # (U*NWFp, K1)

    # ---- fc weight: torch flattens pooled features filter-major -----------------------
    fcw = jnp.transpose(fc_w.reshape(C, F, n_w), (0, 2, 1)).reshape(C, NWF)
    fcw = jnp.pad(fcw, ((0, 0), (0, NWFp - NWF))).astype(jnp.float32)          # (C, NWFp)
    fcb = fc_b.reshape(C, 1).astype(jnp.float32)

    kernel = make_kernel(U, NWFp)

    in_specs = [
        pl.BlockSpec((K1, Bt), lambda i: (0, i)),          # batch-on-lanes embeddings
        pl.BlockSpec((U * NWFp, K1), lambda i: (0, 0)),    # banded conv weights (resident)
        pl.BlockSpec((C, NWFp), lambda i: (0, 0)),         # fc weight (resident)
        pl.BlockSpec((C, 1), lambda i: (0, 0)),            # fc bias (resident)
    ]
    out_specs = pl.BlockSpec((C, Bt), lambda i: (0, i))    # lane-dense whole-block store

    out = pl.pallas_call(
        kernel,
        out_shape=jax.ShapeDtypeStruct((C, B_pad), jnp.float32),
        grid_spec=pltpu.PrefetchScalarGridSpec(
            num_scalar_prefetch=0,
            grid=(n_blocks,),
            in_specs=in_specs,
            out_specs=out_specs,
        ),
        compiler_params=pltpu.CompilerParams(
            dimension_semantics=("parallel",),
            vmem_limit_bytes=32 * 1024 * 1024,
        ),
    )(x, wband, fcw, fcb)
    return out[:, :B].T                                    # (B, C)


def reference_forward(tokens, params):
    """Pure-JAX f32 reference matching the PyTorch forward exactly."""
    emb = jnp.take(params["embedding"], tokens, axis=0)        # (B, L, E)
    B, L, _ = emb.shape
    feats = []
    for i, ws in enumerate(WINDOW_SIZES):
        w = params["conv_w"][i]                                # (F, 1, ws, E)
        b = params["conv_b"][i]                                # (F,)
        xp = jnp.pad(emb, ((0, 0), (ws - 1, ws - 1), (0, 0)))
        t_out = L + ws - 1
        acc = jnp.broadcast_to(b, (B, t_out, w.shape[0]))
        for k in range(ws):
            acc = acc + jnp.einsum("ble,fe->blf", xp[:, k:k + t_out, :], w[:, 0, k, :])
        feats.append(jnp.max(jnp.tanh(acc), axis=1))           # (B, F)
    feat = jnp.stack(feats, axis=2).reshape(B, -1)             # (B, F*n_w), filter-major
    logits = feat @ params["fc_w"].T + params["fc_b"]
    return jax.nn.softmax(logits, axis=1)


if __name__ == "__main__":
    # TODO(synk): the original module loads a gensim word2vec checkpoint for the
    # embedding table; here it is initialized deterministically instead.
    vocab_size, num_classes = 20, 4
    B, L = 2, 8
    n_w = len(WINDOW_SIZES)

    keys = jax.random.split(jax.random.PRNGKey(0), 2 * n_w + 4)
    params = {
        "embedding": jax.random.normal(keys[0], (vocab_size, EMBEDDING_SIZE), jnp.float32),
        "conv_w": [0.2 * jax.random.normal(keys[1 + i],
                                           (NUM_FILTERS, 1, ws, EMBEDDING_SIZE), jnp.float32)
                   for i, ws in enumerate(WINDOW_SIZES)],
        "conv_b": [0.1 * jax.random.normal(keys[1 + n_w + i], (NUM_FILTERS,), jnp.float32)
                   for i in range(n_w)],
        "fc_w": 0.3 * jax.random.normal(keys[1 + 2 * n_w],
                                        (num_classes, NUM_FILTERS * n_w), jnp.float32),
        "fc_b": 0.1 * jax.random.normal(keys[2 + 2 * n_w], (num_classes,), jnp.float32),
    }
    tokens = jax.random.randint(keys[3 + 2 * n_w], (B, L), 0, vocab_size, dtype=jnp.int32)

    probs = jax.block_until_ready(cnn_text_classifier_forward(tokens, params))
    ref = reference_forward(tokens, params)

    assert probs.shape == (B, num_classes)
    # Tolerances loosened for bf16 MXU operands + approximate EUP reciprocal.
    assert jnp.allclose(jnp.sum(probs, axis=1), 1.0, atol=2e-2)
    assert jnp.allclose(probs, ref, atol=3e-2), (probs, ref)
    print("KERNEL_OK")
</pallas_src>

<mosaic_0001>
module attributes {stable_mosaic.version = 11 : i64} {
  func.func @kernel(%arg0: i32, %arg1: memref<168x128xbf16, #tpu.memory_space<vmem>>, %arg2: memref<480x168xbf16, #tpu.memory_space<vmem>>, %arg3: memref<4x40xf32, #tpu.memory_space<vmem>>, %arg4: memref<4x1xf32, #tpu.memory_space<vmem>>, %arg5: memref<4x128xf32, #tpu.memory_space<vmem>>) attributes {dimension_semantics = [#tpu.dimension_semantics<parallel>], iteration_bounds = array<i64: 1>, scalar_prefetch = 0 : i64, scratch_operands = 0 : i64, tpu.core_type = #tpu.core_type<tc>, window_params = [{transform_indices = @transform_0, window_bounds = array<i64: 168, 128>}, {pipeline_mode = #tpu.pipeline_mode<synchronous>, transform_indices = @transform_1, window_bounds = array<i64: 480, 168>}, {pipeline_mode = #tpu.pipeline_mode<synchronous>, transform_indices = @transform_2, window_bounds = array<i64: 4, 40>}, {pipeline_mode = #tpu.pipeline_mode<synchronous>, transform_indices = @transform_3, window_bounds = array<i64: 4, 1>}, {transform_indices = @transform_4, window_bounds = array<i64: 4, 128>}]} {
    %c0 = arith.constant 0 : index
    %c0_0 = arith.constant 0 : index
    %0 = vector.load %arg2[%c0, %c0_0] : memref<480x168xbf16, #tpu.memory_space<vmem>>, vector<480x168xbf16>
    %c0_1 = arith.constant 0 : index
    %c0_2 = arith.constant 0 : index
    %1 = vector.load %arg1[%c0_1, %c0_2] : memref<168x128xbf16, #tpu.memory_space<vmem>>, vector<168x128xbf16>
    %cst = arith.constant dense<0.000000e+00> : vector<480x128xf32>
    %2 = tpu.matmul %0, %1, %cst {dimension_numbers = #tpu.dot_dimension_numbers<[1], [0], [0], [1], [0, 0, 1, 1], [], []>} : vector<480x168xbf16>, vector<168x128xbf16>, vector<480x128xf32> -> vector<480x128xf32>
    %3 = vector.extract_strided_slice %2 {offsets = [0, 0], sizes = [40, 128], strides = [1, 1]} : vector<480x128xf32> to vector<40x128xf32>
    %4 = vector.extract_strided_slice %2 {offsets = [40, 0], sizes = [40, 128], strides = [1, 1]} : vector<480x128xf32> to vector<40x128xf32>
    %5 = arith.maximumf %3, %4 : vector<40x128xf32>
    %6 = vector.extract_strided_slice %2 {offsets = [80, 0], sizes = [40, 128], strides = [1, 1]} : vector<480x128xf32> to vector<40x128xf32>
    %7 = arith.maximumf %5, %6 : vector<40x128xf32>
    %8 = vector.extract_strided_slice %2 {offsets = [120, 0], sizes = [40, 128], strides = [1, 1]} : vector<480x128xf32> to vector<40x128xf32>
    %9 = arith.maximumf %7, %8 : vector<40x128xf32>
    %10 = vector.extract_strided_slice %2 {offsets = [160, 0], sizes = [40, 128], strides = [1, 1]} : vector<480x128xf32> to vector<40x128xf32>
    %11 = arith.maximumf %9, %10 : vector<40x128xf32>
    %12 = vector.extract_strided_slice %2 {offsets = [200, 0], sizes = [40, 128], strides = [1, 1]} : vector<480x128xf32> to vector<40x128xf32>
    %13 = arith.maximumf %11, %12 : vector<40x128xf32>
    %14 = vector.extract_strided_slice %2 {offsets = [240, 0], sizes = [40, 128], strides = [1, 1]} : vector<480x128xf32> to vector<40x128xf32>
    %15 = arith.maximumf %13, %14 : vector<40x128xf32>
    %16 = vector.extract_strided_slice %2 {offsets = [280, 0], sizes = [40, 128], strides = [1, 1]} : vector<480x128xf32> to vector<40x128xf32>
    %17 = arith.maximumf %15, %16 : vector<40x128xf32>
    %18 = vector.extract_strided_slice %2 {offsets = [320, 0], sizes = [40, 128], strides = [1, 1]} : vector<480x128xf32> to vector<40x128xf32>
    %19 = arith.maximumf %17, %18 : vector<40x128xf32>
    %20 = vector.extract_strided_slice %2 {offsets = [360, 0], sizes = [40, 128], strides = [1, 1]} : vector<480x128xf32> to vector<40x128xf32>
    %21 = arith.maximumf %19, %20 : vector<40x128xf32>
    %22 = vector.extract_strided_slice %2 {offsets = [400, 0], sizes = [40, 128], strides = [1, 1]} : vector<480x128xf32> to vector<40x128xf32>
    %23 = arith.maximumf %21, %22 : vector<40x128xf32>
    %24 = vector.extract_strided_slice %2 {offsets = [440, 0], sizes = [40, 128], strides = [1, 1]} : vector<480x128xf32> to vector<40x128xf32>
    %25 = arith.maximumf %23, %24 : vector<40x128xf32>
    %26 = math.tanh %25 : vector<40x128xf32>
    %c0_3 = arith.constant 0 : index
    %c0_4 = arith.constant 0 : index
    %27 = vector.load %arg3[%c0_3, %c0_4] : memref<4x40xf32, #tpu.memory_space<vmem>>, vector<4x40xf32>
    %cst_5 = arith.constant dense<0.000000e+00> : vector<4x128xf32>
    %28 = tpu.matmul %27, %26, %cst_5 {dimension_numbers = #tpu.dot_dimension_numbers<[1], [0], [0], [1], [0, 0, 1, 1], [], []>} : vector<4x40xf32>, vector<40x128xf32>, vector<4x128xf32> -> vector<4x128xf32>
    %c0_6 = arith.constant 0 : index
    %c0_7 = arith.constant 0 : index
    %29 = vector.load %arg4[%c0_6, %c0_7] : memref<4x1xf32, #tpu.memory_space<vmem>>, vector<4x1xf32>
    %30 = vector.broadcast %29 : vector<4x1xf32> to vector<4x128xf32>
    %31 = arith.addf %28, %30 : vector<4x128xf32>
    %cst_8 = arith.constant dense<0xFF800000> : vector<128xf32>
    %32 = vector.multi_reduction <maximumf>, %31, %cst_8 [0] : vector<4x128xf32> to vector<128xf32>
    %33 = vector.shape_cast %32 : vector<128xf32> to vector<1x128xf32>
    %34 = vector.broadcast %33 : vector<1x128xf32> to vector<4x128xf32>
    %35 = arith.subf %31, %34 : vector<4x128xf32>
    %36 = math.exp %35 : vector<4x128xf32>
    %cst_9 = arith.constant dense<0.000000e+00> : vector<128xf32>
    %37 = vector.multi_reduction <add>, %36, %cst_9 [0] : vector<4x128xf32> to vector<128xf32>
    %38 = vector.shape_cast %37 : vector<128xf32> to vector<1x128xf32>
    %39 = tpu.reciprocal %38 {approx = true} : vector<1x128xf32> -> vector<1x128xf32>
    %40 = vector.broadcast %39 : vector<1x128xf32> to vector<4x128xf32>
    %41 = arith.mulf %36, %40 : vector<4x128xf32>
    %c0_10 = arith.constant 0 : index
    %c0_11 = arith.constant 0 : index
    %42 = vector.load %arg5[%c0_10, %c0_11] : memref<4x128xf32, #tpu.memory_space<vmem>>, vector<4x128xf32>
    tpu.vector_store %arg5[%c0_10, %c0_11], %41 {strides = array<i32>} : memref<4x128xf32, #tpu.memory_space<vmem>>, vector<4x128xf32>,
    return
  }
  func.func @transform_0(%arg0: i32) -> (i32, i32) {
    %c0_i32 = arith.constant 0 : i32
    %c0_i32_0 = arith.constant 0 : i32
    return %c0_i32, %arg0 : i32, i32
  }
  func.func @transform_1(%arg0: i32) -> (i32, i32) {
    %c0_i32 = arith.constant 0 : i32
    %c0_i32_0 = arith.constant 0 : i32
    %c0_i32_1 = arith.constant 0 : i32
    return %c0_i32, %c0_i32_0 : i32, i32
  }
  func.func @transform_2(%arg0: i32) -> (i32, i32) {
    %c0_i32 = arith.constant 0 : i32
    %c0_i32_0 = arith.constant 0 : i32
    %c0_i32_1 = arith.constant 0 : i32
    return %c0_i32, %c0_i32_0 : i32, i32
  }
  func.func @transform_3(%arg0: i32) -> (i32, i32) {
    %c0_i32 = arith.constant 0 : i32
    %c0_i32_0 = arith.constant 0 : i32
    %c0_i32_1 = arith.constant 0 : i32
    return %c0_i32, %c0_i32_0 : i32, i32
  }
  func.func @transform_4(%arg0: i32) -> (i32, i32) {
    %c0_i32 = arith.constant 0 : i32
    %c0_i32_0 = arith.constant 0 : i32
    return %c0_i32, %arg0 : i32, i32
  }
}

</mosaic_0001>

<llo_original>
// kernel: tpu_custom_call.1
$region0: #{tpu_custom_call.1}
  #allocation0 [shape = 'u32[]', space=smem, size = 0x4, offset = 0x4, fixed_abs, tag = 'smem constant byte address 0x4 - core index']
  #allocation1 [shape = 'u32[144,128]{1,0:T(1,128)}', space=vmem, size = 0x12000, scoped, tag = 'internal scratch']
  %s0 = inlined_call_operand.vmem [shape: bf16[168,128], index: 0, kind: input, shape index: {}]
  %s1 = inlined_call_operand.vmem [shape: bf16[480,168], index: 1, kind: input, shape index: {}]
  %s2 = inlined_call_operand.vmem [shape: f32[4,40], index: 2, kind: input, shape index: {}]
  %s3 = inlined_call_operand.vmem [shape: f32[4,1], index: 3, kind: input, shape index: {}]
  %s4 = inlined_call_operand.hbm [shape: f32[4,128], index: 4, kind: output, shape index: {}]
  %s5 = sld [smem:[#allocation0]]
  $region26: #{tpu_custom_call.1} parent=0
    _
  %s7 = ssub.s32 1, %s5
  %s8 = scalar_select 0, %s7, %s5
  $region1: #{tpu_custom_call.1} parent=0
    #allocation2 [shape = 'u8[2048]{0}', space=vmem, size = 0x800, scoped, tag = 'output window, operand 0, single buffered']
    #allocation3 [shape = 's32[1]{0}', space=sflag, size = 0x4, scoped, tag = 'scoped memory for tpu_custom_call.1']
    %9 = vsyncpa [#allocation3], 0
    // Predicated region
    $region2: #{tpu_custom_call.1} parent=1 // pred_check
      _
    $region3: #{tpu_custom_call.1} parent=1 // pred_check_branch
      %11 = sbr.rel (0) target = $region5
    $region4: #{tpu_custom_call.1} parent=1 // pred_region
      _
    $region5: #{tpu_custom_call.1} parent=1 // pred_fallthru
      _
    // Predicated region
    $region6: #{tpu_custom_call.1} parent=1 // pred_check
      _
    $region7: #{tpu_custom_call.1} parent=1 // pred_check_branch
      %13 = sbr.rel (0) target = $region9
    $region8: #{tpu_custom_call.1} parent=1 // pred_region
      _
    $region9: #{tpu_custom_call.1} parent=1 // pred_fallthru
      _
    // Predicated region
    $region10: #{tpu_custom_call.1} parent=1 // pred_check
      _
    $region11: #{tpu_custom_call.1} parent=1 // pred_check_branch
      %15 = sbr.rel (0) target = $region13
    $region12: #{tpu_custom_call.1} parent=1 // pred_region
      _
    $region13: #{tpu_custom_call.1} parent=1 // pred_fallthru
      _
    // Predicated region
    $region14: #{tpu_custom_call.1} parent=1 // pred_check
      _
    $region15: #{tpu_custom_call.1} parent=1 // pred_check_branch
      %17 = sbr.rel (0) target = $region17
    $region16: #{tpu_custom_call.1} parent=1 // pred_region
      _
    $region17: #{tpu_custom_call.1} parent=1 // pred_fallthru
      _
    %v19 = vld [vmem:[%s1] sm:$0xff]
    %v20 = vld [vmem:[%s1 + $0x8] sm:$0xff]
    %v21 = vld [vmem:[%s1 + $0x10] sm:$0xff]
    %v22 = vld [vmem:[%s1 + $0x18] sm:$0xff]
    %v23 = vld [vmem:[%s1 + $0x20] sm:$0xff]
    %v24 = vld [vmem:[%s1 + $0x28] sm:$0xff]
    %v25 = vld [vmem:[%s1 + $0x30] sm:$0xff]
    %v26 = vld [vmem:[%s1 + $0x38] sm:$0xff]
    %v27 = vld [vmem:[%s1 + $0x40] sm:$0xff]
    %v28 = vld [vmem:[%s1 + $0x48] sm:$0xff]
    %v29 = vld [vmem:[%s1 + $0x50] sm:$0xff]
    %v30 = vld [vmem:[%s1 + $0x58] sm:$0xff]
    %v31 = vld [vmem:[%s1 + $0x60] sm:$0xff]
    %v32 = vld [vmem:[%s1 + $0x68] sm:$0xff]
    %v33 = vld [vmem:[%s1 + $0x70] sm:$0xff]
    %v34 = vld [vmem:[%s1 + $0x78] sm:$0xff]
    %v35 = vld [vmem:[%s1 + $0x80] sm:$0xff]
    %v36 = vld [vmem:[%s1 + $0x88] sm:$0xff]
    %v37 = vld [vmem:[%s1 + $0x90] sm:$0xff]
    %v38 = vld [vmem:[%s1 + $0x98] sm:$0xff]
    %v39 = vld [vmem:[%s1 + $0xa0] sm:$0xff]
    %v40 = vld [vmem:[%s1 + $0xa8] sm:$0xff]
    %v41 = vld [vmem:[%s1 + $0xb0] sm:$0xff]
    %v42 = vld [vmem:[%s1 + $0xb8] sm:$0xff]
    %v43 = vld [vmem:[%s1 + $0xc0] sm:$0xff]
    %v44 = vld [vmem:[%s1 + $0xc8] sm:$0xff]
    %v45 = vld [vmem:[%s1 + $0xd0] sm:$0xff]
    %v46 = vld [vmem:[%s1 + $0xd8] sm:$0xff]
    %v47 = vld [vmem:[%s1 + $0xe0] sm:$0xff]
    %v48 = vld [vmem:[%s1 + $0xe8] sm:$0xff]
    %v49 = vld [vmem:[%s1 + $0xf0] sm:$0xff]
    %v50 = vld [vmem:[%s1 + $0xf8] sm:$0xff]
    %v51 = vld [vmem:[%s1 + $0x100] sm:$0xff]
    %v52 = vld [vmem:[%s1 + $0x108] sm:$0xff]
    %v53 = vld [vmem:[%s1 + $0x110] sm:$0xff]
    %v54 = vld [vmem:[%s1 + $0x118] sm:$0xff]
    %v55 = vld [vmem:[%s1 + $0x120] sm:$0xff]
    %v56 = vld [vmem:[%s1 + $0x128] sm:$0xff]
    %v57 = vld [vmem:[%s1 + $0x130] sm:$0xff]
    %v58 = vld [vmem:[%s1 + $0x138] sm:$0xff]
    %v59 = vld [vmem:[%s1 + $0x140] sm:$0xff]
    %v60 = vld [vmem:[%s1 + $0x148] sm:$0xff]
    %v61 = vld [vmem:[%s1 + $0x150] sm:$0xff]
    %v62 = vld [vmem:[%s1 + $0x158] sm:$0xff]
    %v63 = vld [vmem:[%s1 + $0x160] sm:$0xff]
    %v64 = vld [vmem:[%s1 + $0x168] sm:$0xff]
    %v65 = vld [vmem:[%s1 + $0x170] sm:$0xff]
    %v66 = vld [vmem:[%s1 + $0x178] sm:$0xff]
    %v67 = vld [vmem:[%s1 + $0x180] sm:$0xff]
    %v68 = vld [vmem:[%s1 + $0x188] sm:$0xff]
    %v69 = vld [vmem:[%s1 + $0x190] sm:$0xff]
    %v70 = vld [vmem:[%s1 + $0x198] sm:$0xff]
    %v71 = vld [vmem:[%s1 + $0x1a0] sm:$0xff]
    %v72 = vld [vmem:[%s1 + $0x1a8] sm:$0xff]
    %v73 = vld [vmem:[%s1 + $0x1b0] sm:$0xff]
    %v74 = vld [vmem:[%s1 + $0x1b8] sm:$0xff]
    %v75 = vld [vmem:[%s1 + $0x1c0] sm:$0xff]
    %v76 = vld [vmem:[%s1 + $0x1c8] sm:$0xff]
    %v77 = vld [vmem:[%s1 + $0x1d0] sm:$0xff]
    %v78 = vld [vmem:[%s1 + $0x1d8] sm:$0xff]
    %v79 = vld [vmem:[%s0] sm:$0xf]
    %v80 = vld [vmem:[%s0 + $0x4] sm:$0xf]
    %v81 = vld [vmem:[%s0 + $0x8] sm:$0xf]
    %v82 = vld [vmem:[%s0 + $0xc] sm:$0xf]
    %v83 = vld [vmem:[%s0 + $0x10] sm:$0xf]
    %v84 = vld [vmem:[%s0 + $0x14] sm:$0xf]
    %v85 = vld [vmem:[%s0 + $0x18] sm:$0xf]
    %v86 = vld [vmem:[%s0 + $0x1c] sm:$0xf]
    %v87 = vld [vmem:[%s0 + $0x20] sm:$0xf]
    %v88 = vld [vmem:[%s0 + $0x24] sm:$0xf]
    %v89 = vld [vmem:[%s0 + $0x28] sm:$0xf]
    %v90 = vld [vmem:[%s0 + $0x2c] sm:$0xf]
    %v91 = vld [vmem:[%s0 + $0x30] sm:$0xf]
    %v92 = vld [vmem:[%s0 + $0x34] sm:$0xf]
    %v93 = vld [vmem:[%s0 + $0x38] sm:$0xf]
    %v94 = vld [vmem:[%s0 + $0x3c] sm:$0xf]
    %v95 = vld [vmem:[%s0 + $0x40] sm:$0xf]
    %v96 = vld [vmem:[%s0 + $0x44] sm:$0xf]
    %v97 = vld [vmem:[%s0 + $0x48] sm:$0xf]
    %v98 = vld [vmem:[%s0 + $0x4c] sm:$0xf]
    %v99 = vld [vmem:[%s0 + $0x50] sm:$0xf]
    %v160 = vunpack.c.l.b16 %v19
    %v161 = vunpack.c.h.b16 %v19
    %v162 = vunpack.c.l.b16 %v20
    %v163 = vunpack.c.h.b16 %v20
    %v164 = vunpack.c.l.b16 %v21
    %v165 = vunpack.c.h.b16 %v21
    %v166 = vunpack.c.l.b16 %v22
    %v167 = vunpack.c.h.b16 %v22
    %v168 = vunpack.c.l.b16 %v23
    %v169 = vunpack.c.h.b16 %v23
    %v170 = vunpack.c.l.b16 %v24
    %v171 = vunpack.c.h.b16 %v24
    %v172 = vunpack.c.l.b16 %v25
    %v173 = vunpack.c.h.b16 %v25
    %v174 = vunpack.c.l.b16 %v26
    %v175 = vunpack.c.h.b16 %v26
    %v176 = vunpack.c.l.b16 %v27
    %v177 = vunpack.c.h.b16 %v27
    %v178 = vunpack.c.l.b16 %v28
    %v179 = vunpack.c.h.b16 %v28
    %v180 = vunpack.c.l.b16 %v29
    %v181 = vunpack.c.h.b16 %v29
    %v182 = vunpack.c.l.b16 %v30
    %v183 = vunpack.c.h.b16 %v30
    %v184 = vunpack.c.l.b16 %v31
    %v185 = vunpack.c.h.b16 %v31
    %v186 = vunpack.c.l.b16 %v32
    %v187 = vunpack.c.h.b16 %v32
    %v188 = vunpack.c.l.b16 %v33
    %v189 = vunpack.c.h.b16 %v33
    %v190 = vunpack.c.l.b16 %v34
    %v191 = vunpack.c.h.b16 %v34
    %v192 = vunpack.c.l.b16 %v35
    %v193 = vunpack.c.h.b16 %v35
    %v194 = vunpack.c.l.b16 %v36
    %v195 = vunpack.c.h.b16 %v36
    %v196 = vunpack.c.l.b16 %v37
    %v197 = vunpack.c.h.b16 %v37
    %v198 = vunpack.c.l.b16 %v38
    %v199 = vunpack.c.h.b16 %v38
    %v200 = vunpack.c.l.b16 %v39
    %v201 = vunpack.c.h.b16 %v39
    %v202 = vunpack.c.l.b16 %v40
    %v203 = vunpack.c.h.b16 %v40
    %v204 = vunpack.c.l.b16 %v41
    %v205 = vunpack.c.h.b16 %v41
    %v206 = vunpack.c.l.b16 %v42
    %v207 = vunpack.c.h.b16 %v42
    %v208 = vunpack.c.l.b16 %v43
    %v209 = vunpack.c.h.b16 %v43
    %v210 = vunpack.c.l.b16 %v44
    %v211 = vunpack.c.h.b16 %v44
    %v212 = vunpack.c.l.b16 %v45
    %v213 = vunpack.c.h.b16 %v45
    %v214 = vunpack.c.l.b16 %v46
    %v215 = vunpack.c.h.b16 %v46
    %v216 = vunpack.c.l.b16 %v47
    %v217 = vunpack.c.h.b16 %v47
    %v218 = vunpack.c.l.b16 %v48
    %v219 = vunpack.c.h.b16 %v48
    %v220 = vunpack.c.l.b16 %v49
    %v221 = vunpack.c.h.b16 %v49
    %v222 = vunpack.c.l.b16 %v50
    %v223 = vunpack.c.h.b16 %v50
    %v224 = vunpack.c.l.b16 %v51
    %v225 = vunpack.c.h.b16 %v51
    %v226 = vunpack.c.l.b16 %v52
    %v227 = vunpack.c.h.b16 %v52
    %v228 = vunpack.c.l.b16 %v53
    %v229 = vunpack.c.h.b16 %v53
    %v230 = vunpack.c.l.b16 %v54
    %v231 = vunpack.c.h.b16 %v54
    %v232 = vunpack.c.l.b16 %v55
    %v233 = vunpack.c.h.b16 %v55
    %v234 = vunpack.c.l.b16 %v56
    %v235 = vunpack.c.h.b16 %v56
    %v236 = vunpack.c.l.b16 %v57
    %v237 = vunpack.c.h.b16 %v57
    %v238 = vunpack.c.l.b16 %v58
    %v239 = vunpack.c.h.b16 %v58
    %v240 = vunpack.c.l.b16 %v59
    %v241 = vunpack.c.h.b16 %v59
    %v242 = vunpack.c.l.b16 %v60
    %v243 = vunpack.c.h.b16 %v60
    %v244 = vunpack.c.l.b16 %v61
    %v245 = vunpack.c.h.b16 %v61
    %v246 = vunpack.c.l.b16 %v62
    %v247 = vunpack.c.h.b16 %v62
    %v248 = vunpack.c.l.b16 %v63
    %v249 = vunpack.c.h.b16 %v63
    %v250 = vunpack.c.l.b16 %v64
    %v251 = vunpack.c.h.b16 %v64
    %v252 = vunpack.c.l.b16 %v65
    %v253 = vunpack.c.h.b16 %v65
    %v254 = vunpack.c.l.b16 %v66
    %v255 = vunpack.c.h.b16 %v66
    %v256 = vunpack.c.l.b16 %v67
    %v257 = vunpack.c.h.b16 %v67
    %v258 = vunpack.c.l.b16 %v68
    %v259 = vunpack.c.h.b16 %v68
    %v260 = vunpack.c.l.b16 %v69
    %v261 = vunpack.c.h.b16 %v69
    %v262 = vunpack.c.l.b16 %v70
    %v263 = vunpack.c.h.b16 %v70
    %v264 = vunpack.c.l.b16 %v71
    %v265 = vunpack.c.h.b16 %v71
    %v266 = vunpack.c.l.b16 %v72
    %v267 = vunpack.c.h.b16 %v72
    %v268 = vunpack.c.l.b16 %v73
    %v269 = vunpack.c.h.b16 %v73
    %v270 = vunpack.c.l.b16 %v74
    %v271 = vunpack.c.h.b16 %v74
    %v272 = vunpack.c.l.b16 %v75
    %v273 = vunpack.c.h.b16 %v75
    %v274 = vunpack.c.l.b16 %v76
    %v275 = vunpack.c.h.b16 %v76
    %v276 = vunpack.c.l.b16 %v77
    %v277 = vunpack.c.h.b16 %v77
    %v278 = vunpack.c.l.b16 %v78
    %v279 = vunpack.c.h.b16 %v78
    %v280 = vpack.c.b16 %v162, %v160
    %v281 = vpack.c.b16 %v163, %v161
    %v282 = vpack.c.b16 %v166, %v164
    %v283 = vpack.c.b16 %v167, %v165
    %v284 = vpack.c.b16 %v170, %v168
    %v285 = vpack.c.b16 %v171, %v169
    %v286 = vpack.c.b16 %v174, %v172
    %v287 = vpack.c.b16 %v175, %v173
    %v288 = vpack.c.b16 %v178, %v176
    %v289 = vpack.c.b16 %v179, %v177
    %v290 = vpack.c.b16 %v182, %v180
    %v291 = vpack.c.b16 %v183, %v181
    %v292 = vpack.c.b16 %v186, %v184
    %v293 = vpack.c.b16 %v187, %v185
    %v294 = vpack.c.b16 %v190, %v188
    %v295 = vpack.c.b16 %v191, %v189
    %v296 = vpack.c.b16 %v194, %v192
    %v297 = vpack.c.b16 %v195, %v193
    %v298 = vpack.c.b16 %v198, %v196
    %v299 = vpack.c.b16 %v199, %v197
    %v300 = vpack.c.b16 %v202, %v200
    %v301 = vpack.c.b16 %v203, %v201
    %v302 = vpack.c.b16 %v206, %v204
    %v303 = vpack.c.b16 %v207, %v205
    %v304 = vpack.c.b16 %v210, %v208
    %v305 = vpack.c.b16 %v211, %v209
    %v306 = vpack.c.b16 %v214, %v212
    %v307 = vpack.c.b16 %v215, %v213
    %v308 = vpack.c.b16 %v218, %v216
    %v309 = vpack.c.b16 %v219, %v217
    %v310 = vpack.c.b16 %v222, %v220
    %v311 = vpack.c.b16 %v223, %v221
    %v312 = vpack.c.b16 %v226, %v224
    %v313 = vpack.c.b16 %v227, %v225
    %v314 = vpack.c.b16 %v230, %v228
    %v315 = vpack.c.b16 %v231, %v229
    %v316 = vpack.c.b16 %v234, %v232
    %v317 = vpack.c.b16 %v235, %v233
    %v318 = vpack.c.b16 %v238, %v236
    %v319 = vpack.c.b16 %v239, %v237
    %v320 = vpack.c.b16 %v242, %v240
    %v321 = vpack.c.b16 %v243, %v241
    %v322 = vpack.c.b16 %v246, %v244
    %v323 = vpack.c.b16 %v247, %v245
    %v324 = vpack.c.b16 %v250, %v248
    %v325 = vpack.c.b16 %v251, %v249
    %v326 = vpack.c.b16 %v254, %v252
    %v327 = vpack.c.b16 %v255, %v253
    %v328 = vpack.c.b16 %v258, %v256
    %v329 = vpack.c.b16 %v259, %v257
    %v330 = vpack.c.b16 %v262, %v260
    %v331 = vpack.c.b16 %v263, %v261
    %v332 = vpack.c.b16 %v266, %v264
    %v333 = vpack.c.b16 %v267, %v265
    %v334 = vpack.c.b16 %v270, %v268
    %v335 = vpack.c.b16 %v271, %v269
    %v336 = vpack.c.b16 %v274, %v272
    %v337 = vpack.c.b16 %v275, %v273
    %v338 = vpack.c.b16 %v278, %v276
    %v339 = vpack.c.b16 %v279, %v277
    %v391 = vunpack.c.l.b16 %v79
    %v392 = vunpack.c.l.b16 %v80
    %v393 = vunpack.c.l.b16 %v81
    %v394 = vunpack.c.l.b16 %v82
    %v395 = vunpack.c.l.b16 %v83
    %v396 = vunpack.c.l.b16 %v84
    %v397 = vunpack.c.l.b16 %v85
    %v398 = vunpack.c.l.b16 %v86
    %v399 = vunpack.c.l.b16 %v87
    %v400 = vunpack.c.l.b16 %v88
    %v401 = vunpack.c.l.b16 %v89
    %v402 = vunpack.c.l.b16 %v90
    %v403 = vunpack.c.l.b16 %v91
    %v404 = vunpack.c.l.b16 %v92
    %v405 = vunpack.c.l.b16 %v93
    %v406 = vunpack.c.l.b16 %v94
    %v407 = vunpack.c.l.b16 %v95
    %v408 = vunpack.c.l.b16 %v96
    %v409 = vunpack.c.l.b16 %v97
    %v410 = vunpack.c.l.b16 %v98
    %v411 = vunpack.c.l.b16 %v99
    %v412 = vpack.c.b16 %v392, %v391
    %v413 = vpack.c.b16 %v394, %v393
    %v414 = vpack.c.b16 %v396, %v395
    %v415 = vpack.c.b16 %v398, %v397
    %v416 = vpack.c.b16 %v400, %v399
    %v417 = vpack.c.b16 %v402, %v401
    %v418 = vpack.c.b16 %v404, %v403
    %v419 = vpack.c.b16 %v406, %v405
    %v420 = vpack.c.b16 %v408, %v407
    %v421 = vpack.c.b16 %v410, %v409
    %v422 = vpack.c.b16 %v411, %v411
    %vm433 = vcmask 326656
    %v435 = vsel %vm433, %v281, 0
    %v438 = vsel %vm433, %v283, 0
    %v441 = vsel %vm433, %v285, 0
    %v444 = vsel %vm433, %v287, 0
    %v447 = vsel %vm433, %v289, 0
    %v450 = vsel %vm433, %v291, 0
    %v453 = vsel %vm433, %v293, 0
    %v456 = vsel %vm433, %v295, 0
    %v459 = vsel %vm433, %v297, 0
    %v462 = vsel %vm433, %v299, 0
    %v465 = vsel %vm433, %v301, 0
    %v468 = vsel %vm433, %v303, 0
    %v471 = vsel %vm433, %v305, 0
    %v474 = vsel %vm433, %v307, 0
    %v477 = vsel %vm433, %v309, 0
    %v480 = vsel %vm433, %v311, 0
    %v483 = vsel %vm433, %v313, 0
    %v486 = vsel %vm433, %v315, 0
    %v489 = vsel %vm433, %v317, 0
    %v492 = vsel %vm433, %v319, 0
    %v495 = vsel %vm433, %v321, 0
    %v498 = vsel %vm433, %v323, 0
    %v501 = vsel %vm433, %v325, 0
    %v504 = vsel %vm433, %v327, 0
    %v507 = vsel %vm433, %v329, 0
    %v510 = vsel %vm433, %v331, 0
    %v513 = vsel %vm433, %v333, 0
    %v516 = vsel %vm433, %v335, 0
    %v519 = vsel %vm433, %v337, 0
    %v522 = vsel %vm433, %v339, 0
    %vm524 = vcmask 1043456
    %v526 = vsel %vm524, %v422, 0
    %528 = vmatprep.subr.bf16.mxu0 0
    %529 = vmatpush1.bf16.msra.mxu0 %v419
    %530 = vmatprep.subr.bf16.mxu0 0
    %531 = vmatpush1.bf16.msra.mxu0 %v418
    %532 = vmatprep.subr.bf16.mxu0 0
    %533 = vmatpush1.bf16.msra.mxu0 %v417
    %534 = vmatprep.subr.bf16.mxu0 0
    %535 = vmatpush1.bf16.msra.mxu0 %v416
    %536 = vmatprep.subr.bf16.mxu0 0
    %537 = vmatpush1.bf16.msra.mxu0 %v415
    %538 = vmatprep.subr.bf16.mxu0 0
    %539 = vmatpush1.bf16.msra.mxu0 %v414
    %540 = vmatprep.subr.bf16.mxu0 0
    %541 = vmatpush1.bf16.msra.mxu0 %v413
    %542 = vmatprep.subr.bf16.mxu0 0
    %543 = vmatpush1.bf16.msra.mxu0 %v412
    %544 = vmatprep.subr.bf16.mxu0 0
    %545 = vmatpush2.bf16.msra.mxu0 0
    %546 = vmatprep.subr.bf16.mxu0 0
    %547 = vmatpush2.bf16.msra.mxu0 0
    %548 = vmatprep.subr.bf16.mxu0 0
    %549 = vmatpush2.bf16.msra.mxu0 0
    %550 = vmatprep.subr.bf16.mxu0 0
    %551 = vmatpush2.bf16.msra.mxu0 0
    %552 = vmatprep.subr.bf16.mxu0 0
    %553 = vmatpush2.bf16.msra.mxu0 0
    %554 = vmatprep.subr.bf16.mxu0 0
    %555 = vmatpush2.bf16.msra.mxu0 %v526
    %556 = vmatprep.subr.bf16.mxu0 0
    %557 = vmatpush2.bf16.msra.mxu0 %v421
    %558 = vmatprep.subr.bf16.mxu0 0
    %559 = vmatpush2.bf16.msra.mxu0 %v420
    %560 = vmatprep.mubr.bf16.mxu0 %v435
    %561 = vmatmul.mubr.bf16.gmra.mxu0 %v280
    %v562 = vpop.f32.mrf.mxu0
    %v563 = vadd.f32 0.0, %v562
    %v564 = vpop.f32.mrf.mxu0
    %v565 = vpop.f32.mrf.mxu0
    %v566 = vadd.f32 0.0, %v565
    %v567 = vpop.f32.mrf.mxu0
    %568 = vmatprep.mubr.bf16.mxu0 %v438
    %569 = vmatmul.mubr.bf16.gmra.mxu0 %v282
    %v570 = vpop.f32.mrf.mxu0
    %v571 = vadd.f32 0.0, %v570
    %v572 = vpop.f32.mrf.mxu0
    %v573 = vpop.f32.mrf.mxu0
    %v574 = vadd.f32 0.0, %v573
    %v575 = vpop.f32.mrf.mxu0
    %576 = vmatprep.mubr.bf16.mxu0 %v441
    %577 = vmatmul.mubr.bf16.gmra.mxu0 %v284
    %v578 = vpop.f32.mrf.mxu0
    %v579 = vadd.f32 0.0, %v578
    %v580 = vpop.f32.mrf.mxu0
    %v581 = vpop.f32.mrf.mxu0
    %v582 = vadd.f32 0.0, %v581
    %v583 = vpop.f32.mrf.mxu0
    %584 = vmatprep.mubr.bf16.mxu0 %v444
    %585 = vmatmul.mubr.bf16.gmra.mxu0 %v286
    %v586 = vpop.f32.mrf.mxu0
    %v587 = vadd.f32 0.0, %v586
    %v588 = vpop.f32.mrf.mxu0
    %v589 = vpop.f32.mrf.mxu0
    %v590 = vadd.f32 0.0, %v589
    %v591 = vpop.f32.mrf.mxu0
    %592 = vmatprep.mubr.bf16.mxu0 %v447
    %593 = vmatmul.mubr.bf16.gmra.mxu0 %v288
    %v594 = vpop.f32.mrf.mxu0
    %v595 = vadd.f32 0.0, %v594
    %v596 = vpop.f32.mrf.mxu0
    %v597 = vpop.f32.mrf.mxu0
    %v598 = vadd.f32 0.0, %v597
    %v599 = vpop.f32.mrf.mxu0
    %600 = vmatprep.mubr.bf16.mxu0 %v450
    %601 = vmatmul.mubr.bf16.gmra.mxu0 %v290
    %v602 = vpop.f32.mrf.mxu0
    %v603 = vadd.f32 0.0, %v602
    %v604 = vpop.f32.mrf.mxu0
    %v605 = vpop.f32.mrf.mxu0
    %v606 = vadd.f32 0.0, %v605
    %v607 = vpop.f32.mrf.mxu0
    %608 = vmatprep.mubr.bf16.mxu0 %v453
    %609 = vmatmul.mubr.bf16.gmra.mxu0 %v292
    %v610 = vpop.f32.mrf.mxu0
    %v611 = vadd.f32 0.0, %v610
    %v612 = vpop.f32.mrf.mxu0
    %v613 = vpop.f32.mrf.mxu0
    %v614 = vadd.f32 0.0, %v613
    %v615 = vpop.f32.mrf.mxu0
    %616 = vmatprep.mubr.bf16.mxu0 %v456
    %617 = vmatmul.mubr.bf16.gmra.mxu0 %v294
    %v618 = vpop.f32.mrf.mxu0
    %v619 = vadd.f32 0.0, %v618
    %v620 = vpop.f32.mrf.mxu0
    %v621 = vpop.f32.mrf.mxu0
    %v622 = vadd.f32 0.0, %v621
    %v623 = vpop.f32.mrf.mxu0
    %624 = vmatprep.mubr.bf16.mxu0 %v459
    %625 = vmatmul.mubr.bf16.gmra.mxu0 %v296
    %v626 = vpop.f32.mrf.mxu0
    %v627 = vadd.f32 0.0, %v626
    %v628 = vpop.f32.mrf.mxu0
    %v629 = vpop.f32.mrf.mxu0
    %v630 = vadd.f32 0.0, %v629
    %v631 = vpop.f32.mrf.mxu0
    %632 = vmatprep.mubr.bf16.mxu0 %v462
    %633 = vmatmul.mubr.bf16.gmra.mxu0 %v298
    %v634 = vpop.f32.mrf.mxu0
    %v635 = vadd.f32 0.0, %v634
    %v636 = vpop.f32.mrf.mxu0
    %v637 = vpop.f32.mrf.mxu0
    %v638 = vadd.f32 0.0, %v637
    %v639 = vpop.f32.mrf.mxu0
    %640 = vmatprep.mubr.bf16.mxu0 %v465
    %641 = vmatmul.mubr.bf16.gmra.mxu0 %v300
    %v642 = vpop.f32.mrf.mxu0
    %v643 = vadd.f32 0.0, %v642
    %v644 = vpop.f32.mrf.mxu0
    %v645 = vpop.f32.mrf.mxu0
    %v646 = vadd.f32 0.0, %v645
    %v647 = vpop.f32.mrf.mxu0
    %648 = vmatprep.mubr.bf16.mxu0 %v468
    %649 = vmatmul.mubr.bf16.gmra.mxu0 %v302
    %v650 = vpop.f32.mrf.mxu0
    %v651 = vadd.f32 0.0, %v650
    %v652 = vpop.f32.mrf.mxu0
    %v653 = vpop.f32.mrf.mxu0
    %v654 = vadd.f32 0.0, %v653
    %v655 = vpop.f32.mrf.mxu0
    %656 = vmatprep.mubr.bf16.mxu0 %v471
    %657 = vmatmul.mubr.bf16.gmra.mxu0 %v304
    %v658 = vpop.f32.mrf.mxu0
    %v659 = vadd.f32 0.0, %v658
    %v660 = vpop.f32.mrf.mxu0
    %v661 = vpop.f32.mrf.mxu0
    %v662 = vadd.f32 0.0, %v661
    %v663 = vpop.f32.mrf.mxu0
    %664 = vmatprep.mubr.bf16.mxu0 %v474
    %665 = vmatmul.mubr.bf16.gmra.mxu0 %v306
    %v666 = vpop.f32.mrf.mxu0
    %v667 = vadd.f32 0.0, %v666
    %v668 = vpop.f32.mrf.mxu0
    %v669 = vpop.f32.mrf.mxu0
    %v670 = vadd.f32 0.0, %v669
    %v671 = vpop.f32.mrf.mxu0
    %672 = vmatprep.mubr.bf16.mxu0 %v477
    %673 = vmatmul.mubr.bf16.gmra.mxu0 %v308
    %v674 = vpop.f32.mrf.mxu0
    %v675 = vadd.f32 0.0, %v674
    %v676 = vpop.f32.mrf.mxu0
    %v677 = vpop.f32.mrf.mxu0
    %v678 = vadd.f32 0.0, %v677
    %v679 = vpop.f32.mrf.mxu0
    %680 = vmatprep.mubr.bf16.mxu0 %v480
    %681 = vmatmul.mubr.bf16.gmra.mxu0 %v310
    %v682 = vpop.f32.mrf.mxu0
    %v683 = vadd.f32 0.0, %v682
    %v684 = vpop.f32.mrf.mxu0
    %v685 = vpop.f32.mrf.mxu0
    %v686 = vadd.f32 0.0, %v685
    %v687 = vpop.f32.mrf.mxu0
    %688 = vmatprep.mubr.bf16.mxu0 %v483
    %689 = vmatmul.mubr.bf16.gmra.mxu0 %v312
    %v690 = vpop.f32.mrf.mxu0
    %v691 = vadd.f32 0.0, %v690
    %v692 = vpop.f32.mrf.mxu0
    %v693 = vpop.f32.mrf.mxu0
    %v694 = vadd.f32 0.0, %v693
    %v695 = vpop.f32.mrf.mxu0
    %696 = vmatprep.mubr.bf16.mxu0 %v486
    %697 = vmatmul.mubr.bf16.gmra.mxu0 %v314
    %v698 = vpop.f32.mrf.mxu0
    %v699 = vadd.f32 0.0, %v698
    %v700 = vpop.f32.mrf.mxu0
    %v701 = vpop.f32.mrf.mxu0
    %v702 = vadd.f32 0.0, %v701
    %v703 = vpop.f32.mrf.mxu0
    %704 = vmatprep.mubr.bf16.mxu0 %v489
    %705 = vmatmul.mubr.bf16.gmra.mxu0 %v316
    %v706 = vpop.f32.mrf.mxu0
    %v707 = vadd.f32 0.0, %v706
    %v708 = vpop.f32.mrf.mxu0
    %v709 = vpop.f32.mrf.mxu0
    %v710 = vadd.f32 0.0, %v709
    %v711 = vpop.f32.mrf.mxu0
    %712 = vmatprep.mubr.bf16.mxu0 %v492
    %713 = vmatmul.mubr.bf16.gmra.mxu0 %v318
    %v714 = vpop.f32.mrf.mxu0
    %v715 = vadd.f32 0.0, %v714
    %v716 = vpop.f32.mrf.mxu0
    %v717 = vpop.f32.mrf.mxu0
    %v718 = vadd.f32 0.0, %v717
    %v719 = vpop.f32.mrf.mxu0
    %720 = vmatprep.mubr.bf16.mxu0 %v495
    %721 = vmatmul.mubr.bf16.gmra.mxu0 %v320
    %v722 = vpop.f32.mrf.mxu0
    %v723 = vadd.f32 0.0, %v722
    %v724 = vpop.f32.mrf.mxu0
    %v725 = vpop.f32.mrf.mxu0
    %v726 = vadd.f32 0.0, %v725
    %v727 = vpop.f32.mrf.mxu0
    %728 = vmatprep.mubr.bf16.mxu0 %v498
    %729 = vmatmul.mubr.bf16.gmra.mxu0 %v322
    %v730 = vpop.f32.mrf.mxu0
    %v731 = vadd.f32 0.0, %v730
    %v732 = vpop.f32.mrf.mxu0
    %v733 = vpop.f32.mrf.mxu0
    %v734 = vadd.f32 0.0, %v733
    %v735 = vpop.f32.mrf.mxu0
    %736 = vmatprep.mubr.bf16.mxu0 %v501
    %737 = vmatmul.mubr.bf16.gmra.mxu0 %v324
    %v738 = vpop.f32.mrf.mxu0
    %v739 = vadd.f32 0.0, %v738
    %v740 = vpop.f32.mrf.mxu0
    %v741 = vpop.f32.mrf.mxu0
    %v742 = vadd.f32 0.0, %v741
    %v743 = vpop.f32.mrf.mxu0
    %744 = vmatprep.mubr.bf16.mxu0 %v504
    %745 = vmatmul.mubr.bf16.gmra.mxu0 %v326
    %v746 = vpop.f32.mrf.mxu0
    %v747 = vadd.f32 0.0, %v746
    %v748 = vpop.f32.mrf.mxu0
    %v749 = vpop.f32.mrf.mxu0
    %v750 = vadd.f32 0.0, %v749
    %v751 = vpop.f32.mrf.mxu0
    %752 = vmatprep.mubr.bf16.mxu0 %v507
    %753 = vmatmul.mubr.bf16.gmra.mxu0 %v328
    %v754 = vpop.f32.mrf.mxu0
    %v755 = vadd.f32 0.0, %v754
    %v756 = vpop.f32.mrf.mxu0
    %v757 = vpop.f32.mrf.mxu0
    %v758 = vadd.f32 0.0, %v757
    %v759 = vpop.f32.mrf.mxu0
    %760 = vmatprep.mubr.bf16.mxu0 %v510
    %761 = vmatmul.mubr.bf16.gmra.mxu0 %v330
    %v762 = vpop.f32.mrf.mxu0
    %v763 = vadd.f32 0.0, %v762
    %v764 = vpop.f32.mrf.mxu0
    %v765 = vpop.f32.mrf.mxu0
    %v766 = vadd.f32 0.0, %v765
    %v767 = vpop.f32.mrf.mxu0
    %768 = vmatprep.mubr.bf16.mxu0 %v513
    %769 = vmatmul.mubr.bf16.gmra.mxu0 %v332
    %v770 = vpop.f32.mrf.mxu0
    %v771 = vadd.f32 0.0, %v770
    %v772 = vpop.f32.mrf.mxu0
    %v773 = vpop.f32.mrf.mxu0
    %v774 = vadd.f32 0.0, %v773
    %v775 = vpop.f32.mrf.mxu0
    %776 = vmatprep.mubr.bf16.mxu0 %v516
    %777 = vmatmul.mubr.bf16.gmra.mxu0 %v334
    %v778 = vpop.f32.mrf.mxu0
    %v779 = vadd.f32 0.0, %v778
    %v780 = vpop.f32.mrf.mxu0
    %v781 = vpop.f32.mrf.mxu0
    %v782 = vadd.f32 0.0, %v781
    %v783 = vpop.f32.mrf.mxu0
    %784 = vmatprep.mubr.bf16.mxu0 %v519
    %785 = vmatmul.mubr.bf16.gmra.mxu0 %v336
    %v786 = vpop.f32.mrf.mxu0
    %v787 = vadd.f32 0.0, %v786
    %v788 = vpop.f32.mrf.mxu0
    %v789 = vpop.f32.mrf.mxu0
    %v790 = vadd.f32 0.0, %v789
    %v791 = vpop.f32.mrf.mxu0
    %792 = vmatprep.mubr.bf16.mxu0 %v522
    %793 = vmatmul.mubr.bf16.gmra.mxu0 %v338
    %v794 = vpop.f32.mrf.mxu0
    %v795 = vadd.f32 0.0, %v794
    %v796 = vpop.f32.mrf.mxu0
    %v797 = vpop.f32.mrf.mxu0
    %v798 = vadd.f32 0.0, %v797
    %v799 = vpop.f32.mrf.mxu0
    %800 = vdwg.mxu0
    %v801 = vmax.f32 %v563, %v582
    %v802 = vmax.f32 %v566, %v587
    %v803 = vmax.f32 %v571, %v590
    %v804 = vmax.f32 %v574, %v595
    %v805 = vmax.f32 %v579, %v598
    %v806 = vmax.f32 %v801, %v603
    %v807 = vmax.f32 %v802, %v606
    %v808 = vmax.f32 %v803, %v611
    %v809 = vmax.f32 %v804, %v614
    %v810 = vmax.f32 %v805, %v619
    %v811 = vmax.f32 %v806, %v622
    %v812 = vmax.f32 %v807, %v627
    %v813 = vmax.f32 %v808, %v630
    %v814 = vmax.f32 %v809, %v635
    %v815 = vmax.f32 %v810, %v638
    %v816 = vmax.f32 %v811, %v643
    %v817 = vmax.f32 %v812, %v646
    %v818 = vmax.f32 %v813, %v651
    %v819 = vmax.f32 %v814, %v654
    %v820 = vmax.f32 %v815, %v659
    %v821 = vmax.f32 %v816, %v662
    %v822 = vmax.f32 %v817, %v667
    %v823 = vmax.f32 %v818, %v670
    %v824 = vmax.f32 %v819, %v675
    %v825 = vmax.f32 %v820, %v678
    %v826 = vmax.f32 %v821, %v683
    %v827 = vmax.f32 %v822, %v686
    %v828 = vmax.f32 %v823, %v691
    %v829 = vmax.f32 %v824, %v694
    %v830 = vmax.f32 %v825, %v699
    %v831 = vmax.f32 %v826, %v702
    %v832 = vmax.f32 %v827, %v707
    %v833 = vmax.f32 %v828, %v710
    %v834 = vmax.f32 %v829, %v715
    %v835 = vmax.f32 %v830, %v718
    %v836 = vmax.f32 %v831, %v723
    %v837 = vmax.f32 %v832, %v726
    %v838 = vmax.f32 %v833, %v731
    %v839 = vmax.f32 %v834, %v734
    %v840 = vmax.f32 %v835, %v739
    %v841 = vmax.f32 %v836, %v742
    %v842 = vmax.f32 %v837, %v747
    %v843 = vmax.f32 %v838, %v750
    %v844 = vmax.f32 %v839, %v755
    %v845 = vmax.f32 %v840, %v758
    %v846 = vmax.f32 %v841, %v763
    %v847 = vmax.f32 %v842, %v766
    %v848 = vmax.f32 %v843, %v771
    %v849 = vmax.f32 %v844, %v774
    %v850 = vmax.f32 %v845, %v779
    %v851 = vmax.f32 %v846, %v782
    %v852 = vmax.f32 %v847, %v787
    %v853 = vmax.f32 %v848, %v790
    %v854 = vmax.f32 %v849, %v795
    %v855 = vmax.f32 %v850, %v798
    %v856 = vtanh.pop %v851
    %v857 = vtanh.pop %v852
    %v858 = vtanh.pop %v853
    %v859 = vtanh.pop %v854
    %v860 = vtanh.pop %v855
    %v861 = vld [vmem:[%s2] sm:$0xf]
    %v862 = vld [vmem:[%s3] sm:$0xf]
    %864 = vset.pattern.permute.xlu0 0
    %865 = vperm.xlu0 %864, %v862
    %v866 = vpop.permute.xlu0 %865
    %v869 = vsel %vm433, %v861, 0
    %871 = vmatprep.subr.mxu0 0.0
    %872 = vmatpush1.msra.mxu0 0.0
    %873 = vmatprep.subr.mxu0 0.0
    %874 = vmatpush1.msra.mxu0 0.0
    %875 = vmatprep.subr.mxu0 0.0
    %876 = vmatpush1.msra.mxu0 0.0
    %877 = vmatprep.subr.mxu0 0.0
    %878 = vmatpush1.msra.mxu0 0.0
    %879 = vmatprep.subr.mxu0 0.0
    %880 = vmatpush1.msra.mxu0 0.0
    %881 = vmatprep.subr.mxu0 0.0
    %882 = vmatpush1.msra.mxu0 0.0
    %883 = vmatprep.subr.mxu0 0.0
    %884 = vmatpush1.msra.mxu0 0.0
    %885 = vmatprep.subr.mxu0 0.0
    %886 = vmatpush1.msra.mxu0 0.0
    %887 = vmatprep.subr.mxu0 0.0
    %888 = vmatpush1.msra.mxu0 0.0
    %889 = vmatprep.subr.mxu0 0.0
    %890 = vmatpush1.msra.mxu0 0.0
    %891 = vmatprep.subr.mxu0 0.0
    %892 = vmatpush1.msra.mxu0 0.0
    %893 = vmatprep.subr.mxu0 0.0
    %894 = vmatpush1.msra.mxu0 %v860
    %895 = vmatprep.subr.mxu0 0.0
    %896 = vmatpush1.msra.mxu0 %v859
    %897 = vmatprep.subr.mxu0 0.0
    %898 = vmatpush1.msra.mxu0 %v858
    %899 = vmatprep.subr.mxu0 0.0
    %900 = vmatpush1.msra.mxu0 %v857
    %901 = vmatprep.subr.mxu0 0.0
    %902 = vmatpush1.msra.mxu0 %v856
    %903 = vmatprep.subr.mxu0 0.0
    %904 = vmatpush2.msra.mxu0 0.0
    %905 = vmatprep.subr.mxu0 0.0
    %906 = vmatpush2.msra.mxu0 0.0
    %907 = vmatprep.subr.mxu0 0.0
    %908 = vmatpush2.msra.mxu0 0.0
    %909 = vmatprep.subr.mxu0 0.0
    %910 = vmatpush2.msra.mxu0 0.0
    %911 = vmatprep.subr.mxu0 0.0
    %912 = vmatpush2.msra.mxu0 0.0
    %913 = vmatprep.subr.mxu0 0.0
    %914 = vmatpush2.msra.mxu0 0.0
    %915 = vmatprep.subr.mxu0 0.0
    %916 = vmatpush2.msra.mxu0 0.0
    %917 = vmatprep.subr.mxu0 0.0
    %918 = vmatpush2.msra.mxu0 0.0
    %919 = vmatprep.subr.mxu0 0.0
    %920 = vmatpush2.msra.mxu0 0.0
    %921 = vmatprep.subr.mxu0 0.0
    %922 = vmatpush2.msra.mxu0 0.0
    %923 = vmatprep.subr.mxu0 0.0
    %924 = vmatpush2.msra.mxu0 0.0
    %925 = vmatprep.subr.mxu0 0.0
    %926 = vmatpush2.msra.mxu0 0.0
    %927 = vmatprep.subr.mxu0 0.0
    %928 = vmatpush2.msra.mxu0 0.0
    %929 = vmatprep.subr.mxu0 0.0
    %930 = vmatpush2.msra.mxu0 0.0
    %931 = vmatprep.subr.mxu0 0.0
    %932 = vmatpush2.msra.mxu0 0.0
    %933 = vmatprep.subr.mxu0 0.0
    %934 = vmatpush2.msra.mxu0 0.0
    %935 = vmatprep.mubr.f32.mxu0 0.0
    %936 = vmatmul.mubr.f32.gmra.mxu0 %v869
    %v937 = vpop.f32.mrf.mxu0
    %v938 = vadd.f32 %v866, %v937
    %v939 = vpop.f32.mrf.mxu0
    %940 = vdwg.mxu0
    %v941 = vsel %vm524, %v938, -inf
    %v942 = vrot.slane %v941, 4
    %v943 = vmax.f32 %v941, %v942
    %v944 = vrot.slane %v943, 2
    %v945 = vmax.f32 %v943, %v944
    %v946 = vrot.slane %v945, 1
    %v947 = vmax.f32 %v945, %v946
    %v948 = vsub.f32 %v938, %v947
    %v949 = vmul.f32 %v948, 1.442695
    %v950 = vpow.pop %v949
    %v951 = vsel %vm524, %v950, 0.0
    %v952 = vrot.slane %v951, 4
    %v953 = vadd.f32 %v951, %v952
    %v954 = vrot.slane %v953, 2
    %v955 = vadd.f32 %v953, %v954
    %v956 = vrot.slane %v955, 1
    %v957 = vadd.f32 %v955, %v956
    %v958 = vrcp.pop %v957
    %v959 = vmul.f32 %v950, %v958
    %960 = vst [vmem:[#allocation2] sm:$0xf] %v959
    // Predicated region
    $region18: #{tpu_custom_call.1} parent=1 // pred_check
      _
    $region19: #{tpu_custom_call.1} parent=1 // pred_check_branch
      %962 = sbr.rel (0) target = $region21
    $region20: #{tpu_custom_call.1} parent=1 // pred_region
      %s964 = ssub.s32 64, 64
      %965 = vsyncadd [#allocation3], %s964
      %s967 = sshll.u32 [#allocation2], 4
      %s968 = int_to_ptr.vmem [resolvable:$true] %s967
      %970 = dma.vmem_to_hbm [thread:$0]  %s968, 64, %s4, [#allocation3]
    $region21: #{tpu_custom_call.1} parent=1 // pred_fallthru
      _
    // Predicated region
    $region22: #{tpu_custom_call.1} parent=1 // pred_check
      _
    $region23: #{tpu_custom_call.1} parent=1 // pred_check_branch
      %972 = sbr.rel (0) target = $region25
    $region24: #{tpu_custom_call.1} parent=1 // pred_region
      %973 = dma.done [#allocation3], 64
    $region25: #{tpu_custom_call.1} parent=1 // pred_fallthru
      _
    %974 = vsyncpa [#allocation3], 1

</llo_original>
